<compile_context>
chip_gen: v5e
topology: v5e:2x2
jax: 0.10.0
libtpu: 0.0.40
codegen_flags: <defaults>
</compile_context>

<pallas_src>
import functools
import math

import jax
import jax.numpy as jnp
from jax.experimental import pallas as pl
from jax.experimental.pallas import tpu as pltpu


# ----------------------------------------------------------------------------
# Pallas kernel #1: fused cost-volume construction + ETA view fusion
# ----------------------------------------------------------------------------
def _cost_fuse_kernel(attn_temp, sqrt_c, ref_ref, warp_ref, out_ref,
                      acc_ref, wsum_ref):
    """Grid = (batch, hw_tile, src_view); the view axis accumulates.

    ref_ref  : (1, C, hw)        reference features (lane-dense H*W)
    warp_ref : (1, 1, C, D, hw)  warped source features of this view
    out_ref  : (1, C, D, hw)     normalized fused cost volume
    acc_ref  : (C, D, hw) VMEM   sum_v w_v * (ref - warp_v)^2
    wsum_ref : (D, hw)    VMEM   1e-8 + sum_v w_v
    """
    v = pl.program_id(2)

    @pl.when(v == 0)
    def _init():
        acc_ref[...] = jnp.zeros_like(acc_ref)
        wsum_ref[...] = jnp.full(wsum_ref.shape, 1e-8, dtype=wsum_ref.dtype)

    ref = ref_ref[0].astype(jnp.float32)        # (C, hw)
    wrp = warp_ref[0, 0].astype(jnp.float32)    # (C, D, hw)

    diff = wrp - ref[:, None, :]
    cor = diff * diff                           # (C, D, hw)

    # ETA attention weight over depth hypotheses (attn_fuse_d=True path).
    s = jnp.sum(cor, axis=0) * (1.0 / attn_temp)             # (D, hw)
    m = jnp.max(s, axis=0, keepdims=True)
    e = jnp.exp(s - m)
    cw = e / jnp.sum(e, axis=0, keepdims=True) * (1.0 / sqrt_c)

    wsum_ref[...] += cw
    acc_ref[...] += cw[None, :, :] * cor

    @pl.when(v == pl.num_programs(2) - 1)
    def _finalize():
        out_ref[0] = (acc_ref[...] / wsum_ref[...][None, :, :]).astype(out_ref.dtype)


# ----------------------------------------------------------------------------
# Pallas kernel #2: softmax over depth + winner-take-all depth / confidence
# ----------------------------------------------------------------------------
def _wta_kernel(D, logits_ref, depth_ref, attn_ref, dsel_ref, conf_ref):
    s = logits_ref[0].astype(jnp.float32)       # (D, hw)
    dh = depth_ref[0].astype(jnp.float32)       # (D, hw)

    m = jnp.max(s, axis=0, keepdims=True)
    e = jnp.exp(s - m)
    attn = e / jnp.sum(e, axis=0, keepdims=True)

    attn_ref[0] = attn.astype(attn_ref.dtype)

    # Gather-free depth selection (strict ">" keeps the first max, like torch).
    best_v = attn[0:1]                          # (1, hw)
    best_d = dh[0:1]
    for d in range(1, D):
        cand_v = attn[d:d + 1]
        cand_d = dh[d:d + 1]
        upd = cand_v > best_v
        best_v = jnp.where(upd, cand_v, best_v)
        best_d = jnp.where(upd, cand_d, best_d)

    dsel_ref[0] = best_d
    conf_ref[0] = best_v


# ----------------------------------------------------------------------------
# JAX helpers (projection algebra, warping, upsampling)
# ----------------------------------------------------------------------------
def _pick_hw_tile(hw, bytes_per_lane, vmem_budget=24 << 20):
    """Largest lane-dense spatial tile that divides H*W and fits the budget."""
    max_tile = max(128, int(vmem_budget // max(bytes_per_lane, 1)))
    max_tile = min(max_tile - max_tile % 128, 4096)
    if hw <= max_tile or max_tile < 128:
        return hw
    for t in range(max_tile, 127, -128):
        if hw % t == 0:
            return t
    return hw   # no 128-multiple divisor -> fall back to the full extent


def _build_proj(p):
    """p: (B, 2, 4, 4) -> 4x4 projection with top 3x4 = K @ extrinsic[:3,:4]."""
    ext = p[:, 0]
    intr = p[:, 1, :3, :3]
    top = jnp.einsum('bij,bjk->bik', intr, ext[:, :3, :4])
    return ext.at[:, :3, :4].set(top)


def _grid_sample_bilinear_zeros(src, grid):
    """F.grid_sample(mode='bilinear', padding_mode='zeros', align_corners=True).

    src: (B, C, Hs, Ws); grid: (B, N, 2) normalized coords -> (B, C, N).
    """
    B, C, Hs, Ws = src.shape
    N = grid.shape[1]
    ix = (grid[..., 0] + 1.0) * (Ws - 1) / 2.0
    iy = (grid[..., 1] + 1.0) * (Hs - 1) / 2.0
    x0 = jnp.floor(ix)
    y0 = jnp.floor(iy)
    srcf = src.reshape(B, C, Hs * Ws)

    def corner(xc, yc, w):
        valid = (xc >= 0) & (xc <= Ws - 1) & (yc >= 0) & (yc <= Hs - 1)
        xi = jnp.clip(xc, 0, Ws - 1).astype(jnp.int32)
        yi = jnp.clip(yc, 0, Hs - 1).astype(jnp.int32)
        flat = yi * Ws + xi                                     # (B, N)
        idx = jnp.broadcast_to(flat[:, None, :], (B, C, N))
        vals = jnp.take_along_axis(srcf, idx, axis=2)           # (B, C, N)
        return vals * (w * valid.astype(src.dtype))[:, None, :]

    wx1 = ix - x0
    wx0 = 1.0 - wx1
    wy1 = iy - y0
    wy0 = 1.0 - wy1
    return (corner(x0, y0, wx0 * wy0) + corner(x0 + 1, y0, wx1 * wy0)
            + corner(x0, y0 + 1, wx0 * wy1) + corner(x0 + 1, y0 + 1, wx1 * wy1))


def homo_warping_jax(src_fea, src_proj, ref_proj, depth_values):
    """JAX port of homo_warping for 4-D src features -> (B, C, D, Hr, Wr)."""
    B, C, Hs, Ws = src_fea.shape
    _, D, Hr, Wr = depth_values.shape
    proj = jnp.einsum('bij,bjk->bik', src_proj, jnp.linalg.inv(ref_proj))
    rot = proj[:, :3, :3]
    trans = proj[:, :3, 3]

    yy, xx = jnp.meshgrid(jnp.arange(Hr, dtype=jnp.float32),
                          jnp.arange(Wr, dtype=jnp.float32), indexing='ij')
    xyz = jnp.stack([xx.reshape(-1), yy.reshape(-1),
                     jnp.ones(Hr * Wr, jnp.float32)], axis=0)        # (3, HW)
    rot_xyz = jnp.einsum('bij,jn->bin', rot, xyz)                    # (B, 3, HW)
    rot_depth_xyz = rot_xyz[:, :, None, :] * depth_values.reshape(B, 1, D, Hr * Wr)
    proj_xyz = rot_depth_xyz + trans[:, :, None, None]               # (B, 3, D, HW)
    z = proj_xyz[:, 2]
    z = jnp.where(z == 0.0, 1e-9, z)
    px = proj_xyz[:, 0] / z
    py = proj_xyz[:, 1] / z
    gx = px / ((Ws - 1) / 2.0) - 1.0
    gy = py / ((Hs - 1) / 2.0) - 1.0
    grid = jnp.stack([gx, gy], axis=-1).reshape(B, D * Hr * Wr, 2)

    # TODO(synk): the bilinear gather itself stays in XLA; Pallas TPU has no
    # clean dynamic-gather primitive for this data-dependent access pattern.
    warped = _grid_sample_bilinear_zeros(src_fea, grid)              # (B, C, D*HW)
    return warped.reshape(B, C, D, Hr, Wr)


def _upsample_bilinear_align_corners(x, scale):
    """x: (B, H, W) -> (B, H*scale, W*scale), bilinear, align_corners=True."""
    scale = int(scale)
    if scale == 1:
        return x
    B, H, W = x.shape
    Ho, Wo = H * scale, W * scale
    ys = jnp.linspace(0.0, H - 1.0, Ho)
    xs = jnp.linspace(0.0, W - 1.0, Wo)
    y0 = jnp.floor(ys).astype(jnp.int32)
    x0 = jnp.floor(xs).astype(jnp.int32)
    y1 = jnp.minimum(y0 + 1, H - 1)
    x1 = jnp.minimum(x0 + 1, W - 1)
    wy = (ys - y0.astype(jnp.float32))[None, :, None]
    wx = (xs - x0.astype(jnp.float32))[None, None, :]

    def g(yi, xi):
        return x[:, yi][:, :, xi]

    top = g(y0, x0) * (1 - wx) + g(y0, x1) * wx
    bot = g(y1, x0) * (1 - wx) + g(y1, x1) * wx
    return top * (1 - wy) + bot * wy


# ----------------------------------------------------------------------------
# stagenet forward (Pallas-backed)
# ----------------------------------------------------------------------------
def stagenet_forward(features, proj_matrices, depth_hypo, regnet_fn, stage_idx,
                     attn_temp=1.0, inverse_depth=False, mono=False,
                     split_itv=1.0):
    """Equivalent of stagenet.forward (eval mode, attn_fuse_d=True, group_cor=False)."""
    # TODO(synk): group_cor=True and attn_fuse_d=False branches are not
    # implemented in the Pallas kernel (only the default configuration).
    ref_feature = features[0]
    src_features = features[1:]
    B, C, H, W = ref_feature.shape
    Bd, D, Hd, Wd = depth_hypo.shape
    assert (Bd, Hd, Wd) == (B, H, W)
    HW = H * W
    V = len(src_features)

    ref_proj = _build_proj(proj_matrices[:, 0])

    # --- homography-warp every source view (native (B, C, D, HW) layout) ----
    warped_views = []
    for src_idx, src_fea in enumerate(src_features):
        src_proj = _build_proj(proj_matrices[:, src_idx + 1])
        warped = homo_warping_jax(src_fea, src_proj, ref_proj, depth_hypo)  # (B,C,D,H,W)
        warped_views.append(warped.reshape(B, C, D, HW))
    warped_all = jnp.stack(warped_views, axis=0).astype(jnp.float32)        # (V,B,C,D,HW)

    ref2 = ref_feature.reshape(B, C, HW).astype(jnp.float32)

    # VMEM per lane (f32): warp block x2, out block x2, acc, ref x2, wsum.
    bytes_per_lane = 4 * (5 * C * D + 2 * C + D)
    hw_t = _pick_hw_tile(HW, bytes_per_lane)
    nt = HW // hw_t

    fuse = pl.pallas_call(
        functools.partial(_cost_fuse_kernel, float(attn_temp), math.sqrt(C)),
        out_shape=jax.ShapeDtypeStruct((B, C, D, HW), jnp.float32),
        grid_spec=pltpu.PrefetchScalarGridSpec(
            num_scalar_prefetch=0,
            grid=(B, nt, V),
            in_specs=[
                pl.BlockSpec((1, C, hw_t), lambda b, t, v: (b, 0, t)),
                pl.BlockSpec((1, 1, C, D, hw_t), lambda b, t, v: (v, b, 0, 0, t)),
            ],
            out_specs=pl.BlockSpec((1, C, D, hw_t), lambda b, t, v: (b, 0, 0, t)),
            scratch_shapes=[
                pltpu.VMEM((C, D, hw_t), jnp.float32),
                pltpu.VMEM((D, hw_t), jnp.float32),
            ]),
        compiler_params=pltpu.CompilerParams(
            dimension_semantics=("parallel", "parallel", "arbitrary")),
    )
    cor_feats = fuse(ref2, warped_all).reshape(B, C, D, H, W)   # no transpose needed

    # --- cost regularization (external network, applied in JAX) ------------
    attn_logits = regnet_fn(cor_feats)                                      # (B,D,H,W)

    logits2 = attn_logits.reshape(B, D, HW).astype(jnp.float32)
    depth2 = depth_hypo.reshape(B, D, HW).astype(jnp.float32)

    wta = pl.pallas_call(
        functools.partial(_wta_kernel, D),
        out_shape=(jax.ShapeDtypeStruct((B, D, HW), jnp.float32),
                   jax.ShapeDtypeStruct((B, 1, HW), jnp.float32),
                   jax.ShapeDtypeStruct((B, 1, HW), jnp.float32)),
        grid_spec=pltpu.PrefetchScalarGridSpec(
            num_scalar_prefetch=0,
            grid=(B, nt),
            in_specs=[pl.BlockSpec((1, D, hw_t), lambda b, t: (b, 0, t)),
                      pl.BlockSpec((1, D, hw_t), lambda b, t: (b, 0, t))],
            out_specs=(pl.BlockSpec((1, D, hw_t), lambda b, t: (b, 0, t)),
                       pl.BlockSpec((1, 1, hw_t), lambda b, t: (b, 0, t)),
                       pl.BlockSpec((1, 1, hw_t), lambda b, t: (b, 0, t)))),
        compiler_params=pltpu.CompilerParams(
            dimension_semantics=("parallel", "parallel")),
    )
    attn2, dsel2, conf2 = wta(logits2, depth2)

    attn_weight = attn2.reshape(B, D, H, W)
    depth = dsel2.reshape(B, H, W)
    conf = conf2.reshape(B, H, W)

    # eval-mode photometric confidence (bilinear, align_corners=True).
    photometric_confidence = _upsample_bilinear_align_corners(
        conf, 2 ** (3 - stage_idx))

    ret = {'depth': depth,
           'photometric_confidence': photometric_confidence,
           'hypo_depth': depth_hypo,
           'attn_weight': attn_weight}
    if inverse_depth:
        last_depth_itv = 1.0 / depth_hypo[:, 2] - 1.0 / depth_hypo[:, 1]
        ret['inverse_min_depth'] = 1.0 / depth + split_itv * last_depth_itv
        ret['inverse_max_depth'] = 1.0 / depth - split_itv * last_depth_itv
    if mono:
        ret['mono_feat'] = ref_feature
    return ret


# ----------------------------------------------------------------------------
# Pure-JAX reference (validates the Pallas kernels)
# ----------------------------------------------------------------------------
def _stagenet_reference(features, proj_matrices, depth_hypo, regnet_fn,
                        stage_idx, attn_temp=1.0):
    ref_feature = features[0]
    src_features = features[1:]
    B, C, H, W = ref_feature.shape
    ref_proj = _build_proj(proj_matrices[:, 0])
    ref_volume = ref_feature[:, :, None, :, :]

    cor_weight_sum = 1e-8
    cor_feats = 0.0
    for i, src_fea in enumerate(src_features):
        src_proj = _build_proj(proj_matrices[:, i + 1])
        warped = homo_warping_jax(src_fea, src_proj, ref_proj, depth_hypo)
        cor_feat = (ref_volume - warped) ** 2
        cor_weight = jax.nn.softmax(cor_feat.sum(1) / attn_temp, axis=1) / math.sqrt(C)
        cor_weight_sum = cor_weight_sum + cor_weight
        cor_feats = cor_feats + cor_weight[:, None] * cor_feat
    cor_feats = cor_feats / cor_weight_sum[:, None]

    attn_weight = jax.nn.softmax(regnet_fn(cor_feats), axis=1)
    idx = jnp.argmax(attn_weight, axis=1)
    depth = jnp.take_along_axis(depth_hypo, idx[:, None], axis=1)[:, 0]
    conf = jnp.max(attn_weight, axis=1)
    conf = _upsample_bilinear_align_corners(conf, 2 ** (3 - stage_idx))
    return depth, attn_weight, conf


if __name__ == "__main__":
    key = jax.random.PRNGKey(0)
    ks = jax.random.split(key, 6)

    B, C, D, H, W = 2, 8, 4, 16, 16          # small but lane-dense (H*W = 256)
    stage_idx = 2

    # features: reference view + 2 source views
    ref_feature = jax.random.normal(ks[0], (B, C, H, W), jnp.float32)
    src_feats = [jax.random.normal(ks[1], (B, C, H, W), jnp.float32),
                 jax.random.normal(ks[2], (B, C, H, W), jnp.float32)]
    features = [ref_feature] + src_feats

    # projection matrices (B, nviews, 2, 4, 4): [.,.,0]=extrinsic, [.,.,1,:3,:3]=K
    f, cx, cy = 20.0, (W - 1) / 2.0, (H - 1) / 2.0
    K = jnp.array([[f, 0., cx], [0., f, cy], [0., 0., 1.]], jnp.float32)

    def rot_z(a):
        c, s = math.cos(a), math.sin(a)
        return jnp.array([[c, -s, 0.], [s, c, 0.], [0., 0., 1.]], jnp.float32)

    def rot_y(a):
        c, s = math.cos(a), math.sin(a)
        return jnp.array([[c, 0., s], [0., 1., 0.], [-s, 0., c]], jnp.float32)

    def extrinsic(Rm, t):
        E = jnp.eye(4, dtype=jnp.float32)
        E = E.at[:3, :3].set(Rm)
        return E.at[:3, 3].set(jnp.asarray(t, jnp.float32))

    def pack_view(E):
        p = jnp.zeros((2, 4, 4), jnp.float32)
        p = p.at[0].set(E)
        p = p.at[1, :3, :3].set(K)
        return p.at[1, 3, 3].set(1.0)

    views = [extrinsic(jnp.eye(3, dtype=jnp.float32), (0., 0., 0.)),
             extrinsic(rot_z(0.02), (0.6, 0.2, 0.1)),
             extrinsic(rot_y(0.03), (-0.5, 0.3, -0.1))]
    proj_one = jnp.stack([pack_view(E) for E in views], axis=0)      # (3, 2, 4, 4)
    proj_two = proj_one.at[:, 0, :3, 3].multiply(1.15)
    proj_matrices = jnp.stack([proj_one, proj_two], axis=0)          # (B, 3, 2, 4, 4)

    # depth hypotheses (positive, per-pixel jitter)
    base = jnp.linspace(4.0, 9.0, D).astype(jnp.float32)
    depth_hypo = base[None, :, None, None] + \
        0.05 * jax.random.normal(ks[3], (B, D, H, W), jnp.float32)

    # TODO(synk): the real regnet is an external 3-D regularization network
    # passed into stagenet.forward; a channel-wise linear head stands in here.
    reg_w = 0.5 * jax.random.normal(ks[4], (C,), jnp.float32)
    reg_b = 0.1

    def regnet_fn(cor):                                   # (B,C,D,H,W) -> (B,D,H,W)
        return jnp.einsum('bcdhw,c->bdhw', cor, reg_w) + reg_b

    ret = stagenet_forward(features, proj_matrices, depth_hypo,
                           regnet_fn, stage_idx)
    jax.block_until_ready(ret['depth'])

    # pure-JAX reference (same warping helper -> validates the Pallas kernels)
    d_ref, a_ref, c_ref = _stagenet_reference(
        features, proj_matrices, depth_hypo, regnet_fn, stage_idx)

    scale = 2 ** (3 - stage_idx)
    assert ret['depth'].shape == (B, H, W)
    assert ret['attn_weight'].shape == (B, D, H, W)
    assert ret['photometric_confidence'].shape == (B, H * scale, W * scale)
    assert jnp.allclose(ret['attn_weight'], a_ref, atol=2e-4, rtol=2e-4), \
        f"attn err {jnp.max(jnp.abs(ret['attn_weight'] - a_ref))}"
    assert jnp.allclose(ret['depth'], d_ref, atol=2e-4, rtol=2e-4), \
        f"depth err {jnp.max(jnp.abs(ret['depth'] - d_ref))}"
    assert jnp.allclose(ret['photometric_confidence'], c_ref, atol=2e-4, rtol=2e-4), \
        f"conf err {jnp.max(jnp.abs(ret['photometric_confidence'] - c_ref))}"

    print("KERNEL_OK")
</pallas_src>

<mosaic_0001>
module attributes {stable_mosaic.version = 11 : i64} {
  func.func @_cost_fuse_kernel(%arg0: i32, %arg1: i32, %arg2: i32, %arg3: memref<1x8x256xf32, #tpu.memory_space<vmem>>, %arg4: memref<1x1x8x4x256xf32, #tpu.memory_space<vmem>>, %arg5: memref<1x8x4x256xf32, #tpu.memory_space<vmem>>, %arg6: memref<8x4x256xf32, #tpu.memory_space<vmem>>, %arg7: memref<4x256xf32, #tpu.memory_space<vmem>>) attributes {dimension_semantics = [#tpu.dimension_semantics<parallel>, #tpu.dimension_semantics<parallel>, #tpu.dimension_semantics<arbitrary>], iteration_bounds = array<i64: 2, 1, 2>, scalar_prefetch = 0 : i64, scratch_operands = 2 : i64, tpu.core_type = #tpu.core_type<tc>, window_params = [{transform_indices = @transform_0, window_bounds = array<i64: 1, 8, 256>}, {transform_indices = @transform_1, window_bounds = array<i64: 1, 1, 8, 4, 256>}, {transform_indices = @transform_2, window_bounds = array<i64: 1, 8, 4, 256>}]} {
    %c0_i32 = arith.constant 0 : i32
    %0 = arith.cmpi eq, %arg2, %c0_i32 : i32
    %1 = arith.extui %0 : i1 to i32
    %c0_i32_0 = arith.constant 0 : i32
    %2 = arith.cmpi ne, %1, %c0_i32_0 : i32
    scf.if %2 {
      %cst_23 = arith.constant 0.000000e+00 : f32
      %37 = vector.broadcast %cst_23 : f32 to vector<8x4x256xf32>
      %c0_24 = arith.constant 0 : index
      %c0_25 = arith.constant 0 : index
      %c0_26 = arith.constant 0 : index
      %38 = vector.load %arg6[%c0_24, %c0_25, %c0_26] : memref<8x4x256xf32, #tpu.memory_space<vmem>>, vector<8x4x256xf32>
      tpu.vector_store %arg6[%c0_24, %c0_25, %c0_26], %37 {strides = array<i32>} : memref<8x4x256xf32, #tpu.memory_space<vmem>>, vector<8x4x256xf32>,
      %cst_27 = arith.constant 9.99999993E-9 : f32
      %39 = vector.broadcast %cst_27 : f32 to vector<4x256xf32>
      %c0_28 = arith.constant 0 : index
      %c0_29 = arith.constant 0 : index
      %40 = vector.load %arg7[%c0_28, %c0_29] : memref<4x256xf32, #tpu.memory_space<vmem>>, vector<4x256xf32>
      tpu.vector_store %arg7[%c0_28, %c0_29], %39 {strides = array<i32>} : memref<4x256xf32, #tpu.memory_space<vmem>>, vector<4x256xf32>,
    } else {
    }
    %c0 = arith.constant 0 : index
    %c0_1 = arith.constant 0 : index
    %c0_2 = arith.constant 0 : index
    %3 = vector.load %arg3[%c0, %c0_1, %c0_2] : memref<1x8x256xf32, #tpu.memory_space<vmem>>, vector<1x8x256xf32>
    %4 = vector.shape_cast %3 : vector<1x8x256xf32> to vector<8x256xf32>
    %c0_3 = arith.constant 0 : index
    %c0_4 = arith.constant 0 : index
    %c0_5 = arith.constant 0 : index
    %c0_6 = arith.constant 0 : index
    %c0_7 = arith.constant 0 : index
    %5 = vector.load %arg4[%c0_3, %c0_4, %c0_5, %c0_6, %c0_7] : memref<1x1x8x4x256xf32, #tpu.memory_space<vmem>>, vector<1x1x8x4x256xf32>
    %6 = vector.shape_cast %5 : vector<1x1x8x4x256xf32> to vector<8x4x256xf32>
    %7 = vector.shape_cast %4 : vector<8x256xf32> to vector<8x1x256xf32>
    %8 = vector.broadcast %7 : vector<8x1x256xf32> to vector<8x4x256xf32>
    %9 = arith.subf %6, %8 : vector<8x4x256xf32>
    %10 = arith.mulf %9, %9 : vector<8x4x256xf32>
    %cst = arith.constant dense<0.000000e+00> : vector<4x256xf32>
    %11 = vector.multi_reduction <add>, %10, %cst [0] : vector<8x4x256xf32> to vector<4x256xf32>
    %cst_8 = arith.constant 1.000000e+00 : f32
    %12 = vector.broadcast %cst_8 : f32 to vector<4x256xf32>
    %13 = arith.mulf %11, %12 : vector<4x256xf32>
    %cst_9 = arith.constant dense<0xFF800000> : vector<256xf32>
    %14 = vector.multi_reduction <maximumf>, %13, %cst_9 [0] : vector<4x256xf32> to vector<256xf32>
    %15 = vector.shape_cast %14 : vector<256xf32> to vector<1x256xf32>
    %16 = vector.broadcast %15 : vector<1x256xf32> to vector<4x256xf32>
    %17 = arith.subf %13, %16 : vector<4x256xf32>
    %18 = math.exp %17 : vector<4x256xf32>
    %cst_10 = arith.constant dense<0.000000e+00> : vector<256xf32>
    %19 = vector.multi_reduction <add>, %18, %cst_10 [0] : vector<4x256xf32> to vector<256xf32>
    %20 = vector.shape_cast %19 : vector<256xf32> to vector<1x256xf32>
    %21 = vector.broadcast %20 : vector<1x256xf32> to vector<4x256xf32>
    %22 = arith.divf %18, %21 : vector<4x256xf32>
    %cst_11 = arith.constant 0.353553385 : f32
    %23 = vector.broadcast %cst_11 : f32 to vector<4x256xf32>
    %24 = arith.mulf %22, %23 : vector<4x256xf32>
    %c0_12 = arith.constant 0 : index
    %c0_13 = arith.constant 0 : index
    %25 = vector.load %arg7[%c0_12, %c0_13] : memref<4x256xf32, #tpu.memory_space<vmem>>, vector<4x256xf32>
    %26 = arith.addf %25, %24 : vector<4x256xf32>
    %c0_14 = arith.constant 0 : index
    %c0_15 = arith.constant 0 : index
    %27 = vector.load %arg7[%c0_14, %c0_15] : memref<4x256xf32, #tpu.memory_space<vmem>>, vector<4x256xf32>
    tpu.vector_store %arg7[%c0_14, %c0_15], %26 {strides = array<i32>} : memref<4x256xf32, #tpu.memory_space<vmem>>, vector<4x256xf32>,
    %c0_16 = arith.constant 0 : index
    %c0_17 = arith.constant 0 : index
    %c0_18 = arith.constant 0 : index
    %28 = vector.load %arg6[%c0_16, %c0_17, %c0_18] : memref<8x4x256xf32, #tpu.memory_space<vmem>>, vector<8x4x256xf32>
    %29 = vector.shape_cast %24 : vector<4x256xf32> to vector<1x4x256xf32>
    %30 = vector.broadcast %29 : vector<1x4x256xf32> to vector<8x4x256xf32>
    %31 = arith.mulf %30, %10 : vector<8x4x256xf32>
    %32 = arith.addf %28, %31 : vector<8x4x256xf32>
    %c0_19 = arith.constant 0 : index
    %c0_20 = arith.constant 0 : index
    %c0_21 = arith.constant 0 : index
    %33 = vector.load %arg6[%c0_19, %c0_20, %c0_21] : memref<8x4x256xf32, #tpu.memory_space<vmem>>, vector<8x4x256xf32>
    tpu.vector_store %arg6[%c0_19, %c0_20, %c0_21], %32 {strides = array<i32>} : memref<8x4x256xf32, #tpu.memory_space<vmem>>, vector<8x4x256xf32>,
    %c1_i32 = arith.constant 1 : i32
    %34 = arith.cmpi eq, %arg2, %c1_i32 : i32
    %35 = arith.extui %34 : i1 to i32
    %c0_i32_22 = arith.constant 0 : i32
    %36 = arith.cmpi ne, %35, %c0_i32_22 : i32
    scf.if %36 {
      %c0_23 = arith.constant 0 : index
      %c0_24 = arith.constant 0 : index
      %c0_25 = arith.constant 0 : index
      %37 = vector.load %arg6[%c0_23, %c0_24, %c0_25] : memref<8x4x256xf32, #tpu.memory_space<vmem>>, vector<8x4x256xf32>
      %c0_26 = arith.constant 0 : index
      %c0_27 = arith.constant 0 : index
      %38 = vector.load %arg7[%c0_26, %c0_27] : memref<4x256xf32, #tpu.memory_space<vmem>>, vector<4x256xf32>
      %39 = vector.shape_cast %38 : vector<4x256xf32> to vector<1x4x256xf32>
      %40 = vector.broadcast %39 : vector<1x4x256xf32> to vector<8x4x256xf32>
      %41 = arith.divf %37, %40 : vector<8x4x256xf32>
      %c0_28 = arith.constant 0 : index
      %c0_29 = arith.constant 0 : index
      %c0_30 = arith.constant 0 : index
      %c0_31 = arith.constant 0 : index
      %42 = vector.load %arg5[%c0_28, %c0_29, %c0_30, %c0_31] : memref<1x8x4x256xf32, #tpu.memory_space<vmem>>, vector<1x8x4x256xf32>
      %43 = vector.shape_cast %42 : vector<1x8x4x256xf32> to vector<8x4x256xf32>
      %44 = vector.shape_cast %41 : vector<8x4x256xf32> to vector<1x8x4x256xf32>
      tpu.vector_store %arg5[%c0_28, %c0_29, %c0_30, %c0_31], %44 {strides = array<i32>} : memref<1x8x4x256xf32, #tpu.memory_space<vmem>>, vector<1x8x4x256xf32>,
    } else {
    }
    return
  }
  func.func @transform_0(%arg0: i32, %arg1: i32, %arg2: i32) -> (i32, i32, i32) {
    %c0_i32 = arith.constant 0 : i32
    %c0_i32_0 = arith.constant 0 : i32
    return %arg0, %c0_i32, %arg1 : i32, i32, i32
  }
  func.func @transform_1(%arg0: i32, %arg1: i32, %arg2: i32) -> (i32, i32, i32, i32, i32) {
    %c0_i32 = arith.constant 0 : i32
    %c0_i32_0 = arith.constant 0 : i32
    %c0_i32_1 = arith.constant 0 : i32
    return %arg2, %arg0, %c0_i32, %c0_i32_0, %arg1 : i32, i32, i32, i32, i32
  }
  func.func @transform_2(%arg0: i32, %arg1: i32, %arg2: i32) -> (i32, i32, i32, i32) {
    %c0_i32 = arith.constant 0 : i32
    %c0_i32_0 = arith.constant 0 : i32
    %c0_i32_1 = arith.constant 0 : i32
    return %arg0, %c0_i32, %c0_i32_0, %arg1 : i32, i32, i32, i32
  }
}

</mosaic_0001>

<llo_original>
// kernel: tpu_custom_call.1
$region0: #{tpu_custom_call.1}
  #allocation0 [shape = 'u32[]', space=smem, size = 0x4, offset = 0x4, fixed_abs, tag = 'smem constant byte address 0x4 - core index']
  #allocation1 [shape = 'u32[72,128]{1,0:T(1,128)}', space=vmem, size = 0x9000, scoped, tag = 'internal scratch']
  #allocation2 [shape = 'f32[8,4,256]{2,1,0:T(4,128)}', space=vmem, size = 0x8000, scoped, tag = 'scratch operand']
  #allocation3 [shape = 'f32[4,256]{1,0:T(4,128)}', space=vmem, size = 0x1000, scoped, tag = 'scratch operand']
  %s0 = inlined_call_operand.hbm [shape: f32[2,8,256], index: 0, kind: input, shape index: {}]
  %s1 = inlined_call_operand.hbm [shape: f32[2,2,8,4,256], index: 1, kind: input, shape index: {}]
  %s2 = inlined_call_operand.hbm [shape: f32[2,8,4,256], index: 2, kind: output, shape index: {}]
  %s3 = sld [smem:[#allocation0]]
  $region57: #{tpu_custom_call.1} parent=0
    _
  %s5 = ssub.s32 1, %s3
  %s6 = scalar_select 0, %s5, %s3
  $region1: #{tpu_custom_call.1} parent=0
    #allocation4 [shape = 'u8[16384]{0}', space=vmem, size = 0x4000, scoped, tag = 'input window, operand 0']
    #allocation5 [shape = 's32[2]{0}', space=sflag, size = 0x8, scoped, tag = 'scoped memory for tpu_custom_call.1']
    #allocation6 [shape = 's32[2]{0}', space=sflag, size = 0x8, scoped, tag = 'scoped memory for tpu_custom_call.1']
    #allocation7 [shape = 'u8[65536]{0}', space=vmem, size = 0x10000, scoped, tag = 'input window, operand 1']
    #allocation8 [shape = 's32[2]{0}', space=sflag, size = 0x8, scoped, tag = 'scoped memory for tpu_custom_call.1']
    #allocation9 [shape = 'u8[65536]{0}', space=vmem, size = 0x10000, scoped, tag = 'output window, operand 0']
    %7 = vsyncpa [#allocation5], 0
    %s8 = scalar_lea.sflag [#allocation5], 1
    %9 = vsyncpa %s8, 0
    %10 = vsyncpa [#allocation8], 0
    %s11 = scalar_lea.sflag [#allocation8], 1
    %12 = vsyncpa %s11, 0
    %13 = vsyncpa [#allocation6], 0
    %s14 = scalar_lea.sflag [#allocation6], 1
    %15 = vsyncpa %s14, 0
    loop: start=0, step=1, limit=6
    $region2: #{tpu_custom_call.1} parent=1 // loop_pre_header
      _
    $region3: #{tpu_custom_call.1} parent=1 // loop_header
      %s17 = sphi 0, %s21
      %p18 = scmp.ge.s32.totalorder %s17, 6
      %s24 = sphi 0, %s43
      %s25 = sphi 0, %s39
      %s26 = sphi 0, %s35
      %s27 = sphi 0, %s24
      %s28 = sphi 0, %s25
      %s29 = sphi 0, %s26
      %s30 = sphi 0, %s27
      %s31 = sphi 0, %s28
      %s32 = sphi 0, %s29
      %s48 = sphi 0, %s50
      %s51 = sphi 0, %s48
      %s52 = sphi 0, %s51
      %s68 = sphi 0, %s52
      %s78 = sphi 0, %s80
      %s81 = sphi 0, %s78
      %s82 = sphi 0, %s81
      %s98 = sphi 0, %s82
      %s106 = sphi 0, %s108
      %s109 = sphi 0, %s106
      %s110 = sphi 0, %s109
      %s126 = sphi 0, %s110
    $region4: #{tpu_custom_call.1} parent=1 // loop_header_branch
      %20 = sbr.rel (%p18) target = $region8
    $region5: #{tpu_custom_call.1} parent=1 // loop_body
      %s22 = ssub.s32 %s17, 1
      %s23 = ssub.s32 %s17, 2
      %s33 = sadd.s32 1, %s26
      %p34 = scmp.ge.s32.totalorder %s33, 2
      %s35 = scalar_select %p34, 0, %s33
      %s36 = sadd.s32 1, %s25
      %s37 = scalar_select %p34, %s36, %s25
      %p38 = scmp.ge.s32.totalorder %s37, 1
      %s39 = scalar_select %p38, 0, %s37
      %s40 = sadd.s32 1, %s24
      %s41 = scalar_select %p38, %s40, %s24
      %p42 = scmp.ge.s32.totalorder %s41, 2
      %s43 = scalar_select %p42, 0, %s41
      %s44 = ssub.s32 %s24, %s43
      %s45 = ssub.s32 %s25, %s39
      %s46 = sor.u32 %s44, %s45
      %p47 = scmp.eq.s32.totalorder %s46, 0
      %s49 = sadd.s32 %s48, 1
      %s50 = scalar_select %p47, %s48, %s49
      %p53 = pneg %p47
      %p54 = scmp.eq.s32.totalorder %s17, 3
      %p55 = por %p53, %p54
      %p56 = scmp.ne.s32.totalorder %s48, %s51
      %p57 = scmp.eq.s32.totalorder %s17, 0
      %p58 = por %p56, %p57
      %p59 = scmp.ne.s32.totalorder %s48, %s51
      %p60 = scmp.eq.s32.totalorder %s22, 3
      %p61 = por %p59, %p60
      %p62 = scmp.ne.s32.totalorder %s51, %s52
      %p63 = scmp.eq.s32.totalorder %s22, 0
      %p64 = por %p62, %p63
      %p65 = scmp.ne.s32.totalorder %s51, %s52
      %p66 = scmp.eq.s32.totalorder %s23, 3
      %p67 = por %p65, %p66
      %p69 = scmp.ne.s32.totalorder %s52, %s68
      %p70 = scmp.eq.s32.totalorder %s23, 0
      %p71 = por %p69, %p70
      %s72 = ssub.s32 %s26, %s35
      %s73 = ssub.s32 %s24, %s43
      %s74 = sor.u32 %s72, %s73
      %s75 = ssub.s32 %s25, %s39
      %s76 = sor.u32 %s74, %s75
      %p77 = scmp.eq.s32.totalorder %s76, 0
      %s79 = sadd.s32 %s78, 1
      %s80 = scalar_select %p77, %s78, %s79
      %p83 = pneg %p77
      %p84 = scmp.eq.s32.totalorder %s17, 3
      %p85 = por %p83, %p84
      %p86 = scmp.ne.s32.totalorder %s78, %s81
      %p87 = scmp.eq.s32.totalorder %s17, 0
      %p88 = por %p86, %p87
      %p89 = scmp.ne.s32.totalorder %s78, %s81
      %p90 = scmp.eq.s32.totalorder %s22, 3
      %p91 = por %p89, %p90
      %p92 = scmp.ne.s32.totalorder %s81, %s82
      %p93 = scmp.eq.s32.totalorder %s22, 0
      %p94 = por %p92, %p93
      %p95 = scmp.ne.s32.totalorder %s81, %s82
      %p96 = scmp.eq.s32.totalorder %s23, 3
      %p97 = por %p95, %p96
      %p99 = scmp.ne.s32.totalorder %s82, %s98
      %p100 = scmp.eq.s32.totalorder %s23, 0
      %p101 = por %p99, %p100
      %s102 = ssub.s32 %s24, %s43
      %s103 = ssub.s32 %s25, %s39
      %s104 = sor.u32 %s102, %s103
      %p105 = scmp.eq.s32.totalorder %s104, 0
      %s107 = sadd.s32 %s106, 1
      %s108 = scalar_select %p105, %s106, %s107
      %p111 = pneg %p105
      %p112 = scmp.eq.s32.totalorder %s17, 3
      %p113 = por %p111, %p112
      %p114 = scmp.ne.s32.totalorder %s106, %s109
      %p115 = scmp.eq.s32.totalorder %s17, 0
      %p116 = por %p114, %p115
      %p117 = scmp.ne.s32.totalorder %s106, %s109
      %p118 = scmp.eq.s32.totalorder %s22, 3
      %p119 = por %p117, %p118
      %p120 = scmp.ne.s32.totalorder %s109, %s110
      %p121 = scmp.eq.s32.totalorder %s22, 0
      %p122 = por %p120, %p121
      %p123 = scmp.ne.s32.totalorder %s109, %s110
      %p124 = scmp.eq.s32.totalorder %s23, 3
      %p125 = por %p123, %p124
      %p127 = scmp.ne.s32.totalorder %s110, %s126
      %p128 = scmp.eq.s32.totalorder %s23, 0
      %p129 = por %p127, %p128
      %p130 = scmp.le.s32.totalorder 1, %s17
      %p131 = scmp.lt.s32.totalorder %s17, 5
      %p132 = pnand %p130, %p131
      %p133 = pneg %p132
      // Predicated region
      $region9: #{tpu_custom_call.1} parent=5 // pred_check
        _
      $region10: #{tpu_custom_call.1} parent=5 // pred_check_branch
        %135 = sbr.rel (%p132) target = $region12
      $region11: #{tpu_custom_call.1} parent=5 // pred_region
        %s136 = ssub.s32 %s17, 1
      $region12: #{tpu_custom_call.1} parent=5 // pred_fallthru
        _
      %p137 = scmp.lt.s32.totalorder %s17, 4
      // Predicated region
      $region13: #{tpu_custom_call.1} parent=5 // pred_check
        %p138 = pneg %p137
      $region14: #{tpu_custom_call.1} parent=5 // pred_check_branch
        %140 = sbr.rel (%p138) target = $region16
      $region15: #{tpu_custom_call.1} parent=5 // pred_region
        // Predicated region
        $region17: #{tpu_custom_call.1} parent=15 // pred_check
          %p141 = pneg %p58
        $region18: #{tpu_custom_call.1} parent=15 // pred_check_branch
          %143 = sbr.rel (%p141) target = $region20
        $region19: #{tpu_custom_call.1} parent=15 // pred_region
          %s144 = sand.u32 %s48, 1
          %s145 = scalar_lea.sflag [#allocation5], %s144
          %s146 = sand.u32 %s48, 1
          %s147 = smul.addr %s146, 16
          %s148 = scalar_lea.vmem [#allocation4], %s147
          %s149 = smul.u32 2, %s25
          %151 = vsyncadd %s145, 0
          %s152 = smul.addr %s24, 2
          %s153 = sadd.s32 %s149, %s152
          %s154 = smul.addr %s153, 8
          %s155 = scalar_lea.hbm %s0, %s154
          %s157 = sshll.u32 %s155, 4
          %s158 = int_to_ptr.hbm [resolvable:$true] %s157
          %s159 = sshll.u32 %s148, 4
          %s160 = int_to_ptr.vmem [resolvable:$true] %s159
          %162 = dma.hbm_to_vmem [thread:$0]  %s158, 256, %s160, %s145
        $region20: #{tpu_custom_call.1} parent=15 // pred_fallthru
          _
        // Predicated region
        $region21: #{tpu_custom_call.1} parent=15 // pred_check
          %p163 = pneg %p88
        $region22: #{tpu_custom_call.1} parent=15 // pred_check_branch
          %165 = sbr.rel (%p163) target = $region24
        $region23: #{tpu_custom_call.1} parent=15 // pred_region
          %s166 = sand.u32 %s78, 1
          %s167 = scalar_lea.sflag [#allocation8], %s166
          %s168 = sand.u32 %s78, 1
          %s169 = smul.addr %s168, 64
          %s170 = scalar_lea.vmem [#allocation7], %s169
          %s171 = smul.u32 2, %s25
          %173 = vsyncadd %s167, 0
          %s174 = smul.addr %s24, 16
          %s175 = sadd.s32 %s171, %s174
          %s176 = smul.addr %s26, 32
          %s177 = sadd.s32 %s175, %s176
          %s178 = smul.addr %s177, 4
          %s179 = scalar_lea.hbm %s1, %s178
          %s180 = sshll.u32 %s179, 4
          %s181 = int_to_ptr.hbm [resolvable:$true] %s180
          %s182 = sshll.u32 %s170, 4
          %s183 = int_to_ptr.vmem [resolvable:$true] %s182
          %188 = dma.hbm_to_vmem [thread:$0]  %s181, 1024, %s183, %s167, 128, 128, 8
        $region24: #{tpu_custom_call.1} parent=15 // pred_fallthru
          _
      $region16: #{tpu_custom_call.1} parent=5 // pred_fallthru
        _
      %p189 = scmp.le.s32.totalorder 1, %s17
      %p190 = scmp.lt.s32.totalorder %s17, 5
      %p191 = pnand %p189, %p190
      %p192 = pneg %p191
      // Predicated region
      $region25: #{tpu_custom_call.1} parent=5 // pred_check
        _
      $region26: #{tpu_custom_call.1} parent=5 // pred_check_branch
        %194 = sbr.rel (%p191) target = $region28
      $region27: #{tpu_custom_call.1} parent=5 // pred_region
        %s195 = ssub.s32 %s17, 1
        %s196 = sand.u32 %s51, 1
        %s197 = scalar_lea.sflag [#allocation5], %s196
        %s198 = sand.u32 %s51, 1
        %s199 = smul.addr %s198, 16
        %s200 = scalar_lea.vmem [#allocation4], %s199
        // Predicated region
        $region29: #{tpu_custom_call.1} parent=27 // pred_check
          %p201 = pneg %p64
        $region30: #{tpu_custom_call.1} parent=27 // pred_check_branch
          %203 = sbr.rel (%p201) target = $region32
        $region31: #{tpu_custom_call.1} parent=27 // pred_region
          %205 = dma.done %s197, 256
        $region32: #{tpu_custom_call.1} parent=27 // pred_fallthru
          _
        %s206 = sand.u32 %s81, 1
        %s207 = scalar_lea.sflag [#allocation8], %s206
        %s208 = sand.u32 %s81, 1
        %s209 = smul.addr %s208, 64
        %s210 = scalar_lea.vmem [#allocation7], %s209
        // Predicated region
        $region33: #{tpu_custom_call.1} parent=27 // pred_check
          %p211 = pneg %p94
        $region34: #{tpu_custom_call.1} parent=27 // pred_check_branch
          %213 = sbr.rel (%p211) target = $region36
        $region35: #{tpu_custom_call.1} parent=27 // pred_region
          %215 = dma.done %s207, 1024
        $region36: #{tpu_custom_call.1} parent=27 // pred_fallthru
          _
        %s216 = sand.u32 %s51, 1
        %s217 = scalar_lea.sflag [#allocation5], %s216
        %s218 = sand.u32 %s51, 1
        %s219 = smul.addr %s218, 16
        %s220 = scalar_lea.vmem [#allocation4], %s219
        %p221 = pneg %p64
        %p222 = pneg %p61
        %s223 = sand.u32 %s81, 1
        %s224 = scalar_lea.sflag [#allocation8], %s223
        %s225 = sand.u32 %s81, 1
        %s226 = smul.addr %s225, 64
        %s227 = scalar_lea.vmem [#allocation7], %s226
        %p228 = pneg %p94
        %p229 = pneg %p91
        %p230 = pneg %p122
        %p231 = pneg %p119
        %s232 = sand.u32 %s109, 1
        %s233 = scalar_lea.sflag [#allocation6], %s232
        %s234 = sand.u32 %s109, 1
        %s235 = smul.addr %s234, 64
        %s236 = scalar_lea.vmem [#allocation9], %s235
        %s237 = smul.u32 2, %s28
        %s238 = smul.u32 2, %s28
        %s239 = smul.u32 2, %s28
        %p240 = scmp.eq.s32.totalorder %s29, 0
        // Predicated region
        $region37: #{tpu_custom_call.1} parent=27 // pred_check
          %p241 = pneg %p240
        $region38: #{tpu_custom_call.1} parent=27 // pred_check_branch
          %243 = sbr.rel (%p241) target = $region40
        $region39: #{tpu_custom_call.1} parent=27 // pred_region
          %244 = vst [vmem:[#allocation2] sm:$0xff] 0.0
          %245 = vst [vmem:[#allocation2 + $0x8] sm:$0xff] 0.0
          %246 = vst [vmem:[#allocation2 + $0x10] sm:$0xff] 0.0
          %247 = vst [vmem:[#allocation2 + $0x18] sm:$0xff] 0.0
          %248 = vst [vmem:[#allocation2 + $0x20] sm:$0xff] 0.0
          %249 = vst [vmem:[#allocation2 + $0x28] sm:$0xff] 0.0
          %250 = vst [vmem:[#allocation2 + $0x30] sm:$0xff] 0.0
          %251 = vst [vmem:[#allocation2 + $0x38] sm:$0xff] 0.0
          %252 = vst [vmem:[#allocation3] sm:$0xff] 1e-08
        $region40: #{tpu_custom_call.1} parent=27 // pred_fallthru
          _
        %v253 = vld [vmem:[%s200] sm:$0xff]
        %v254 = vld [vmem:[%s200 + $0x8] sm:$0xff]
        %v255 = vld [vmem:[%s210] sm:$0xff]
        %v256 = vld [vmem:[%s210 + $0x8] sm:$0xff]
        %v257 = vld [vmem:[%s210 + $0x10] sm:$0xff]
        %v258 = vld [vmem:[%s210 + $0x18] sm:$0xff]
        %v259 = vld [vmem:[%s210 + $0x20] sm:$0xff]
        %v260 = vld [vmem:[%s210 + $0x28] sm:$0xff]
        %v261 = vld [vmem:[%s210 + $0x30] sm:$0xff]
        %v262 = vld [vmem:[%s210 + $0x38] sm:$0xff]
        %v265 = vrot.slane %v254, 7
        %vm266 = vcmask 1040384
        %v267 = vsel %vm266, %v253, %v265
        %vm268 = vcmask 1041409
        %v269 = vsel %vm268, %v253, %v265
        %v270 = vrot.slane %v269, 1
        %vm271 = vcmask 1042434
        %v272 = vsel %vm271, %v253, %v265
        %v273 = vrot.slane %v272, 2
        %vm274 = vcmask 1043459
        %v275 = vsel %vm274, %v253, %v265
        %v276 = vrot.slane %v275, 3
        %vm277 = vcmask 1044484
        %v278 = vsel %vm277, %v253, %v265
        %v279 = vrot.slane %v278, 4
        %vm280 = vcmask 1045509
        %v281 = vsel %vm280, %v253, %v265
        %v282 = vrot.slane %v281, 5
        %vm283 = vcmask 1046534
        %v284 = vsel %vm283, %v253, %v265
        %v285 = vrot.slane %v284, 6
        %vm286 = vcmask 1046528
        %v287 = vsel %vm286, %v265, %v253
        %v288 = vrot.slane %v287, 7
        %v289 = vperm.slane %v267, 0
        %v290 = vperm.slane %v267, 1
        %v291 = vperm.slane %v270, 0
        %v292 = vperm.slane %v270, 1
        %v293 = vperm.slane %v273, 0
        %v294 = vperm.slane %v273, 1
        %v295 = vperm.slane %v276, 0
        %v296 = vperm.slane %v276, 1
        %v297 = vperm.slane %v279, 0
        %v298 = vperm.slane %v279, 1
        %v299 = vperm.slane %v282, 0
        %v300 = vperm.slane %v282, 1
        %v301 = vperm.slane %v285, 0
        %v302 = vperm.slane %v285, 1
        %v303 = vperm.slane %v288, 0
        %v304 = vperm.slane %v288, 1
        %v305 = vrot.slane %v290, 4
        %v306 = vrot.slane %v292, 4
        %v307 = vrot.slane %v294, 4
        %v308 = vrot.slane %v296, 4
        %v309 = vrot.slane %v298, 4
        %v310 = vrot.slane %v300, 4
        %v311 = vrot.slane %v302, 4
        %v312 = vrot.slane %v304, 4
        %vm313 = vcmask 1043456
        %v314 = vsel %vm313, %v289, %v305
        %v315 = vsel %vm313, %v291, %v306
        %v316 = vsel %vm313, %v293, %v307
        %v317 = vsel %vm313, %v295, %v308
        %v318 = vsel %vm313, %v297, %v309
        %v319 = vsel %vm313, %v299, %v310
        %v320 = vsel %vm313, %v301, %v311
        %v321 = vsel %vm313, %v303, %v312
        %v330 = vsub.f32 %v255, %v314
        %v331 = vsub.f32 %v256, %v315
        %v332 = vsub.f32 %v257, %v316
        %v333 = vsub.f32 %v258, %v317
        %v334 = vsub.f32 %v259, %v318
        %v335 = vsub.f32 %v260, %v319
        %v336 = vsub.f32 %v261, %v320
        %v337 = vsub.f32 %v262, %v321
        %v338 = vmul.f32 %v330, %v330
        %v339 = vmul.f32 %v331, %v331
        %v340 = vmul.f32 %v332, %v332
        %v341 = vmul.f32 %v333, %v333
        %v342 = vmul.f32 %v334, %v334
        %v343 = vmul.f32 %v335, %v335
        %v344 = vmul.f32 %v336, %v336
        %v345 = vmul.f32 %v337, %v337
        %354 = vst [vmem:[#allocation1] ss:$2 sm:$0xff] %v338
        %v355 = vld.sshfl [vmem:[#allocation1] sm:$0xff pattern:$0x75316420]
        %v356 = vld.sshfl [vmem:[#allocation1 + $0x8] sm:$0xff pattern:$0x75316420]
        %s357 = scalar_lea.vmem [#allocation1], 16
        %358 = vst [vmem:[%s357] ss:$2 sm:$0xff] %v339
        %v359 = vld.sshfl [vmem:[#allocation1 + $0x10] sm:$0xff pattern:$0x75316420]
        %v360 = vld.sshfl [vmem:[#allocation1 + $0x18] sm:$0xff pattern:$0x75316420]
        %s361 = scalar_lea.vmem [#allocation1], 32
        %362 = vst [vmem:[%s361] ss:$2 sm:$0xff] %v340
        %v363 = vld.sshfl [vmem:[#allocation1 + $0x20] sm:$0xff pattern:$0x75316420]
        %v364 = vld.sshfl [vmem:[#allocation1 + $0x28] sm:$0xff pattern:$0x75316420]
        %s365 = scalar_lea.vmem [#allocation1], 48
        %366 = vst [vmem:[%s365] ss:$2 sm:$0xff] %v341
        %v367 = vld.sshfl [vmem:[#allocation1 + $0x30] sm:$0xff pattern:$0x75316420]
        %v368 = vld.sshfl [vmem:[#allocation1 + $0x38] sm:$0xff pattern:$0x75316420]
        %369 = vst [vmem:[#allocation1] ss:$2 sm:$0xff] %v342
        %v370 = vld.sshfl [vmem:[#allocation1] sm:$0xff pattern:$0x75316420]
        %v371 = vld.sshfl [vmem:[#allocation1 + $0x8] sm:$0xff pattern:$0x75316420]
        %372 = vst [vmem:[%s357] ss:$2 sm:$0xff] %v343
        %v373 = vld.sshfl [vmem:[#allocation1 + $0x10] sm:$0xff pattern:$0x75316420]
        %v374 = vld.sshfl [vmem:[#allocation1 + $0x18] sm:$0xff pattern:$0x75316420]
        %375 = vst [vmem:[%s361] ss:$2 sm:$0xff] %v344
        %v376 = vld.sshfl [vmem:[#allocation1 + $0x20] sm:$0xff pattern:$0x75316420]
        %v377 = vld.sshfl [vmem:[#allocation1 + $0x28] sm:$0xff pattern:$0x75316420]
        %378 = vst [vmem:[%s365] ss:$2 sm:$0xff] %v345
        %v379 = vld.sshfl [vmem:[#allocation1 + $0x30] sm:$0xff pattern:$0x75316420]
        %v380 = vld.sshfl [vmem:[#allocation1 + $0x38] sm:$0xff pattern:$0x75316420]
        %v397 = vsel %vm313, %v355, 0.0
        %v398 = vsel %vm313, %v359, 0.0
        %v399 = vadd.f32 %v397, %v398
        %v400 = vsel %vm313, %v363, 0.0
        %v401 = vadd.f32 %v399, %v400
        %v402 = vsel %vm313, %v367, 0.0
        %v403 = vadd.f32 %v401, %v402
        %v404 = vsel %vm313, %v370, 0.0
        %v405 = vadd.f32 %v403, %v404
        %v406 = vsel %vm313, %v373, 0.0
        %v407 = vadd.f32 %v405, %v406
        %v408 = vsel %vm313, %v376, 0.0
        %v409 = vadd.f32 %v407, %v408
        %v410 = vsel %vm313, %v379, 0.0
        %v411 = vadd.f32 %v409, %v410
        %v412 = vsel %vm313, %v356, 0.0
        %v413 = vsel %vm313, %v360, 0.0
        %v414 = vadd.f32 %v412, %v413
        %v415 = vsel %vm313, %v364, 0.0
        %v416 = vadd.f32 %v414, %v415
        %v417 = vsel %vm313, %v368, 0.0
        %v418 = vadd.f32 %v416, %v417
        %v419 = vsel %vm313, %v371, 0.0
        %v420 = vadd.f32 %v418, %v419
        %v421 = vsel %vm313, %v374, 0.0
        %v422 = vadd.f32 %v420, %v421
        %v423 = vsel %vm313, %v377, 0.0
        %v424 = vadd.f32 %v422, %v423
        %v425 = vsel %vm313, %v380, 0.0
        %v426 = vadd.f32 %v424, %v425
        %v427 = vsel %vm313, %v411, -inf
        %v428 = vrot.slane %v427, 4
        %v429 = vmax.f32 %v427, %v428
        %v430 = vrot.slane %v429, 2
        %v431 = vmax.f32 %v429, %v430
        %v432 = vrot.slane %v431, 1
        %v433 = vmax.f32 %v431, %v432
        %v434 = vsel %vm313, %v426, -inf
        %v435 = vrot.slane %v434, 4
        %v436 = vmax.f32 %v434, %v435
        %v437 = vrot.slane %v436, 2
        %v438 = vmax.f32 %v436, %v437
        %v439 = vrot.slane %v438, 1
        %v440 = vmax.f32 %v438, %v439
        %v441 = vsub.f32 %v411, %v433
        %v442 = vsub.f32 %v426, %v440
        %v443 = vmul.f32 %v441, 1.442695
        %v444 = vpow.pop %v443
        %v445 = vmul.f32 %v442, 1.442695
        %v446 = vpow.pop %v445
        %v447 = vsel %vm313, %v444, 0.0
        %v448 = vrot.slane %v447, 4
        %v449 = vadd.f32 %v447, %v448
        %v450 = vrot.slane %v449, 2
        %v451 = vadd.f32 %v449, %v450
        %v452 = vrot.slane %v451, 1
        %v453 = vadd.f32 %v451, %v452
        %v454 = vsel %vm313, %v446, 0.0
        %v455 = vrot.slane %v454, 4
        %v456 = vadd.f32 %v454, %v455
        %v457 = vrot.slane %v456, 2
        %v458 = vadd.f32 %v456, %v457
        %v459 = vrot.slane %v458, 1
        %v460 = vadd.f32 %v458, %v459
        %v461 = vrcp.pop %v453
        %v462 = vmul.f32 %v453, %v461
        %v463 = vsub.f32 1.0, %v462
        %v464 = vmul.f32 %v461, %v463
        %v465 = vadd.f32 %v461, %v464
        %vm466 = vweird.f32 %v453
        %vm467 = vweird.f32 %v461
        %vm468 = vmor %vm466, %vm467
        %v469 = vsel %vm468, %v461, %v465
        %v470 = vand.u32 2147483647, %v453
        %vm471 = vcmp.eq.f32.partialorder %v470, 8.507059e+37
        %v472 = vand.u32 %v453, 2147483648
        %v473 = vor.u32 1.1754944e-38, %v472
        %v474 = vsel %vm471, %v473, %v469
        %v475 = vmul.f32 %v444, %v474
        %v476 = vrcp.pop %v460
        %v477 = vmul.f32 %v460, %v476
        %v478 = vsub.f32 1.0, %v477
        %v479 = vmul.f32 %v476, %v478
        %v480 = vadd.f32 %v476, %v479
        %vm481 = vweird.f32 %v460
        %vm482 = vweird.f32 %v476
        %vm483 = vmor %vm481, %vm482
        %v484 = vsel %vm483, %v476, %v480
        %v485 = vand.u32 2147483647, %v460
        %vm486 = vcmp.eq.f32.partialorder %v485, 8.507059e+37
        %v487 = vand.u32 %v460, 2147483648
        %v488 = vor.u32 1.1754944e-38, %v487
        %v489 = vsel %vm486, %v488, %v484
        %v490 = vmul.f32 %v446, %v489
        %v491 = vmul.f32 %v475, 0.35355338
        %v492 = vmul.f32 %v490, 0.35355338
        %v493 = vld [vmem:[#allocation3] sm:$0xff]
        %v496 = vrot.slane %v492, 4
        %v497 = vsel %vm313, %v491, %v496
        %v499 = vadd.f32 %v493, %v497
        %500 = vst [vmem:[#allocation3] sm:$0xff] %v499
        %v501 = vld [vmem:[#allocation2] sm:$0xff]
        %v502 = vld [vmem:[#allocation2 + $0x8] sm:$0xff]
        %v503 = vld [vmem:[#allocation2 + $0x10] sm:$0xff]
        %v504 = vld [vmem:[#allocation2 + $0x18] sm:$0xff]
        %v505 = vld [vmem:[#allocation2 + $0x20] sm:$0xff]
        %v506 = vld [vmem:[#allocation2 + $0x28] sm:$0xff]
        %v507 = vld [vmem:[#allocation2 + $0x30] sm:$0xff]
        %v508 = vld [vmem:[#allocation2 + $0x38] sm:$0xff]
        %509 = vst [vmem:[#allocation1] ss:$2 sm:$0xff] %v338
        %v510 = vld.sshfl [vmem:[#allocation1] sm:$0xff pattern:$0x75316420]
        %v511 = vld.sshfl [vmem:[#allocation1 + $0x8] sm:$0xff pattern:$0x75316420]
        %s512 = scalar_lea.vmem [#allocation1], 16
        %513 = vst [vmem:[%s512] ss:$2 sm:$0xff] %v339
        %v514 = vld.sshfl [vmem:[#allocation1 + $0x10] sm:$0xff pattern:$0x75316420]
        %v515 = vld.sshfl [vmem:[#allocation1 + $0x18] sm:$0xff pattern:$0x75316420]
        %s516 = scalar_lea.vmem [#allocation1], 32
        %517 = vst [vmem:[%s516] ss:$2 sm:$0xff] %v340
        %v518 = vld.sshfl [vmem:[#allocation1 + $0x20] sm:$0xff pattern:$0x75316420]
        %v519 = vld.sshfl [vmem:[#allocation1 + $0x28] sm:$0xff pattern:$0x75316420]
        %s520 = scalar_lea.vmem [#allocation1], 48
        %521 = vst [vmem:[%s520] ss:$2 sm:$0xff] %v341
        %v522 = vld.sshfl [vmem:[#allocation1 + $0x30] sm:$0xff pattern:$0x75316420]
        %v523 = vld.sshfl [vmem:[#allocation1 + $0x38] sm:$0xff pattern:$0x75316420]
        %524 = vst [vmem:[#allocation1] ss:$2 sm:$0xff] %v342
        %v525 = vld.sshfl [vmem:[#allocation1] sm:$0xff pattern:$0x75316420]
        %v526 = vld.sshfl [vmem:[#allocation1 + $0x8] sm:$0xff pattern:$0x75316420]
        %527 = vst [vmem:[%s512] ss:$2 sm:$0xff] %v343
        %v528 = vld.sshfl [vmem:[#allocation1 + $0x10] sm:$0xff pattern:$0x75316420]
        %v529 = vld.sshfl [vmem:[#allocation1 + $0x18] sm:$0xff pattern:$0x75316420]
        %530 = vst [vmem:[%s516] ss:$2 sm:$0xff] %v344
        %v531 = vld.sshfl [vmem:[#allocation1 + $0x20] sm:$0xff pattern:$0x75316420]
        %v532 = vld.sshfl [vmem:[#allocation1 + $0x28] sm:$0xff pattern:$0x75316420]
        %533 = vst [vmem:[%s520] ss:$2 sm:$0xff] %v345
        %v534 = vld.sshfl [vmem:[#allocation1 + $0x30] sm:$0xff pattern:$0x75316420]
        %v535 = vld.sshfl [vmem:[#allocation1 + $0x38] sm:$0xff pattern:$0x75316420]
        %v552 = vmul.f32 %v491, %v510
        %v553 = vmul.f32 %v492, %v511
        %v554 = vmul.f32 %v491, %v514
        %v555 = vmul.f32 %v492, %v515
        %v556 = vmul.f32 %v491, %v518
        %v557 = vmul.f32 %v492, %v519
        %v558 = vmul.f32 %v491, %v522
        %v559 = vmul.f32 %v492, %v523
        %v560 = vmul.f32 %v491, %v525
        %v561 = vmul.f32 %v492, %v526
        %v562 = vmul.f32 %v491, %v528
        %v563 = vmul.f32 %v492, %v529
        %v564 = vmul.f32 %v491, %v531
        %v565 = vmul.f32 %v492, %v532
        %v566 = vmul.f32 %v491, %v534
        %v567 = vmul.f32 %v492, %v535
        %v584 = vrot.slane %v553, 4
        %v585 = vrot.slane %v555, 4
        %v586 = vrot.slane %v557, 4
        %v587 = vrot.slane %v559, 4
        %v588 = vrot.slane %v561, 4
        %v589 = vrot.slane %v563, 4
        %v590 = vrot.slane %v565, 4
        %v591 = vrot.slane %v567, 4
        %v592 = vsel %vm313, %v552, %v584
        %v593 = vsel %vm313, %v554, %v585
        %v594 = vsel %vm313, %v556, %v586
        %v595 = vsel %vm313, %v558, %v587
        %v596 = vsel %vm313, %v560, %v588
        %v597 = vsel %vm313, %v562, %v589
        %v598 = vsel %vm313, %v564, %v590
        %v599 = vsel %vm313, %v566, %v591
        %v608 = vadd.f32 %v501, %v592
        %v609 = vadd.f32 %v502, %v593
        %v610 = vadd.f32 %v503, %v594
        %v611 = vadd.f32 %v504, %v595
        %v612 = vadd.f32 %v505, %v596
        %v613 = vadd.f32 %v506, %v597
        %v614 = vadd.f32 %v507, %v598
        %v615 = vadd.f32 %v508, %v599
        %616 = vst [vmem:[#allocation2] sm:$0xff] %v608
        %617 = vst [vmem:[#allocation2 + $0x8] sm:$0xff] %v609
        %618 = vst [vmem:[#allocation2 + $0x10] sm:$0xff] %v610
        %619 = vst [vmem:[#allocation2 + $0x18] sm:$0xff] %v611
        %620 = vst [vmem:[#allocation2 + $0x20] sm:$0xff] %v612
        %621 = vst [vmem:[#allocation2 + $0x28] sm:$0xff] %v613
        %622 = vst [vmem:[#allocation2 + $0x30] sm:$0xff] %v614
        %623 = vst [vmem:[#allocation2 + $0x38] sm:$0xff] %v615
        %p624 = scmp.eq.s32.totalorder %s29, 1
        // Predicated region
        $region41: #{tpu_custom_call.1} parent=27 // pred_check
          %p625 = pneg %p624
        $region42: #{tpu_custom_call.1} parent=27 // pred_check_branch
          %627 = sbr.rel (%p625) target = $region44
        $region43: #{tpu_custom_call.1} parent=27 // pred_region
          %v628 = vld [vmem:[#allocation2] sm:$0xff]
          %v629 = vld [vmem:[#allocation2 + $0x8] sm:$0xff]
          %v630 = vld [vmem:[#allocation2 + $0x10] sm:$0xff]
          %v631 = vld [vmem:[#allocation2 + $0x18] sm:$0xff]
          %v632 = vld [vmem:[#allocation2 + $0x20] sm:$0xff]
          %v633 = vld [vmem:[#allocation2 + $0x28] sm:$0xff]
          %v634 = vld [vmem:[#allocation2 + $0x30] sm:$0xff]
          %v635 = vld [vmem:[#allocation2 + $0x38] sm:$0xff]
          %v636 = vld [vmem:[#allocation3] sm:$0xff]
          %v637 = vrcp.pop %v636
          %v638 = vmul.f32 %v636, %v637
          %v639 = vsub.f32 1.0, %v638
          %v640 = vmul.f32 %v637, %v639
          %v641 = vadd.f32 %v637, %v640
          %vm642 = vweird.f32 %v636
          %vm643 = vweird.f32 %v637
          %vm644 = vmor %vm642, %vm643
          %v645 = vsel %vm644, %v637, %v641
          %v646 = vand.u32 2147483647, %v636
          %vm647 = vcmp.eq.f32.partialorder %v646, 8.507059e+37
          %v648 = vand.u32 %v636, 2147483648
          %v649 = vor.u32 1.1754944e-38, %v648
          %v650 = vsel %vm647, %v649, %v645
          %v651 = vmul.f32 %v628, %v650
          %v652 = vmul.f32 %v629, %v650
          %v653 = vmul.f32 %v630, %v650
          %v654 = vmul.f32 %v631, %v650
          %v655 = vmul.f32 %v632, %v650
          %v656 = vmul.f32 %v633, %v650
          %v657 = vmul.f32 %v634, %v650
          %v658 = vmul.f32 %v635, %v650
          %659 = vst [vmem:[%s236] sm:$0xff] %v651
          %660 = vst [vmem:[%s236 + $0x8] sm:$0xff] %v652
          %661 = vst [vmem:[%s236 + $0x10] sm:$0xff] %v653
          %662 = vst [vmem:[%s236 + $0x18] sm:$0xff] %v654
          %663 = vst [vmem:[%s236 + $0x20] sm:$0xff] %v655
          %664 = vst [vmem:[%s236 + $0x28] sm:$0xff] %v656
          %665 = vst [vmem:[%s236 + $0x30] sm:$0xff] %v657
          %666 = vst [vmem:[%s236 + $0x38] sm:$0xff] %v658
        $region44: #{tpu_custom_call.1} parent=27 // pred_fallthru
          _
        %s667 = sand.u32 %s109, 1
        %s668 = scalar_lea.sflag [#allocation6], %s667
        %s669 = sand.u32 %s109, 1
        %s670 = smul.addr %s669, 64
        %s671 = scalar_lea.vmem [#allocation9], %s670
        // Predicated region
        $region45: #{tpu_custom_call.1} parent=27 // pred_check
          %p672 = pneg %p119
        $region46: #{tpu_custom_call.1} parent=27 // pred_check_branch
          %674 = sbr.rel (%p672) target = $region48
        $region47: #{tpu_custom_call.1} parent=27 // pred_region
          %s675 = smul.u32 2, %s28
          %677 = vsyncadd %s668, 0
          %s678 = smul.addr %s27, 16
          %s679 = sadd.s32 %s675, %s678
          %s680 = smul.addr %s679, 4
          %s681 = scalar_lea.hbm %s2, %s680
          %s682 = sshll.u32 %s671, 4
          %s683 = int_to_ptr.vmem [resolvable:$true] %s682
          %s684 = sshll.u32 %s681, 4
          %s685 = int_to_ptr.hbm [resolvable:$true] %s684
          %690 = dma.vmem_to_hbm [thread:$0]  %s683, 1024, %s685, %s668, 128, 128, 8
        $region48: #{tpu_custom_call.1} parent=27 // pred_fallthru
          _
      $region28: #{tpu_custom_call.1} parent=5 // pred_fallthru
        _
      %p691 = scmp.le.s32.totalorder 2, %s17
      // Predicated region
      $region49: #{tpu_custom_call.1} parent=5 // pred_check
        %p692 = pneg %p691
      $region50: #{tpu_custom_call.1} parent=5 // pred_check_branch
        %694 = sbr.rel (%p692) target = $region52
      $region51: #{tpu_custom_call.1} parent=5 // pred_region
        %s695 = ssub.s32 %s17, 2
        // Predicated region
        $region53: #{tpu_custom_call.1} parent=51 // pred_check
          %p696 = pneg %p125
        $region54: #{tpu_custom_call.1} parent=51 // pred_check_branch
          %698 = sbr.rel (%p696) target = $region56
        $region55: #{tpu_custom_call.1} parent=51 // pred_region
          %s699 = sand.u32 %s110, 1
          %s700 = scalar_lea.sflag [#allocation6], %s699
          %s701 = sand.u32 %s110, 1
          %s702 = smul.addr %s701, 64
          %s703 = scalar_lea.vmem [#allocation9], %s702
          %705 = dma.done %s700, 1024
        $region56: #{tpu_custom_call.1} parent=51 // pred_fallthru
          _
      $region52: #{tpu_custom_call.1} parent=5 // pred_fallthru
        _
    $region6: #{tpu_custom_call.1} parent=1 // loop_footer
      %s21 = sadd.s32 1, %s17
    $region7: #{tpu_custom_call.1} parent=1 // loop_footer_branch
      %16 = sbr.rel target = $region3
    $region8: #{tpu_custom_call.1} parent=1 // loop_exit
      _
    %706 = vsyncpa [#allocation5], 1
    %s707 = scalar_lea.sflag [#allocation5], 1
    %708 = vsyncpa %s707, 1
    %709 = vsyncpa [#allocation8], 1
    %s710 = scalar_lea.sflag [#allocation8], 1
    %711 = vsyncpa %s710, 1
    %712 = vsyncpa [#allocation6], 1
    %s713 = scalar_lea.sflag [#allocation6], 1
    %714 = vsyncpa %s713, 1

</llo_original>
